<compile_context>
chip_gen: v7x
topology: tpu7x:2x2x1
jax: 0.10.0
libtpu: 0.0.40
codegen_flags: <defaults>
</compile_context>

<pallas_src>
import jax
import jax.numpy as jnp
from jax import lax
from jax.experimental import pallas as pl
from jax.experimental.pallas import tpu as pltpu

HIDDEN_DIM = 32
INPUT_DIM = 1
NUM_LAYERS = 2
OUTPUT_DIM = 1
OUT_PAD = 128          # lane-dense padded FC output width


def _lstm_kernel(addend_ref,   # (T+1, B, 8H) per-step gate addend, grouped + g-prescaled
                 wbig_ref,     # (2H, 8H)     fused recurrent weights, grouped + g-prescaled
                 wfc_ref,      # (H, OUT_PAD)
                 bfc_ref,      # (1, OUT_PAD)
                 out_ref):     # (B, OUT_PAD)
    n_steps = addend_ref.shape[0]          # T + 1 (extra fused "epilogue" step)
    B = addend_ref.shape[1]
    H = wfc_ref.shape[0]

    wbig = wbig_ref[...]                   # hoisted: stays resident across the loop

    # ---- prologue: layer0 at t=0  (h0(-1)=c0(-1)=0 -> gates are just the addend).
    # Single sigmoid pass; the g columns were pre-scaled by 2, so
    # tanh(x) = 2*sigmoid(2x) - 1 is one VPU multiply-add on the g block.
    a0 = addend_ref[0]                                     # (B, 8H)
    act0 = jax.nn.sigmoid(a0)
    i0 = act0[:, 0:H]
    g0 = act0[:, 4 * H:5 * H] * 2.0 - 1.0
    o0 = act0[:, 6 * H:7 * H]
    c0 = i0 * g0
    h0 = o0 * jnp.tanh(c0)
    zeros_h = jnp.zeros((B, H), jnp.float32)
    h_both = jnp.concatenate([h0, zeros_h], axis=1)        # [h0(0) | h1(-1)=0]
    c_both = jnp.concatenate([c0, zeros_h], axis=1)        # [c0(0) | c1(-1)=0]

    # ---- skewed main loop: iteration s computes layer0(s) and layer1(s-1)
    # with a single (B,2H)@(2H,8H) MXU op.  The last iteration (s = T, addend
    # row T = bias-only) absorbs the old layer-1 epilogue: afterwards
    # h_both[:, H:2H] = h1(T-1).  Statically unrolled (T is small/fixed).
    for s in range(1, n_steps):
        # f32 operands; Mosaic's default matmul handling keeps 1e-4 accuracy.
        gates = jnp.dot(h_both, wbig,
                        preferred_element_type=jnp.float32) + addend_ref[s]
        act = jax.nn.sigmoid(gates)                        # one EUP pass, all 8H lanes
        i_b = act[:, 0:2 * H]
        f_b = act[:, 2 * H:4 * H]
        g_b = act[:, 4 * H:6 * H] * 2.0 - 1.0              # tanh via identity
        o_b = act[:, 6 * H:8 * H]
        c_both = f_b * c_both + i_b * g_b
        h_both = o_b * jnp.tanh(c_both)
        # now: h_both = [h0(s) | h1(s-1)],  c_both = [c0(s) | c1(s-1)]

    # ---- fc(out[:, -1, :]) with lane-dense padded output (unmasked store)
    h1 = h_both[:, H:2 * H]                                # h1(T-1)
    out_ref[...] = (jnp.dot(h1, wfc_ref[...], preferred_element_type=jnp.float32)
                    + bfc_ref[...]).astype(out_ref.dtype)


def init_params(key, input_dim=INPUT_DIM, hidden_dim=HIDDEN_DIM,
                output_dim=OUTPUT_DIM):
    """Deterministic init matching PyTorch parameter shapes (uniform +-1/sqrt(H))."""
    k = 1.0 / jnp.sqrt(jnp.float32(hidden_dim))
    keys = jax.random.split(key, 12)
    u = lambda kk, shape: jax.random.uniform(kk, shape, jnp.float32, -k, k)
    params = {
        "w_ih_l0": u(keys[0], (4 * hidden_dim, input_dim)),
        "w_hh_l0": u(keys[1], (4 * hidden_dim, hidden_dim)),
        "b_ih_l0": u(keys[2], (4 * hidden_dim,)),
        "b_hh_l0": u(keys[3], (4 * hidden_dim,)),
        "w_ih_l1": u(keys[4], (4 * hidden_dim, hidden_dim)),
        "w_hh_l1": u(keys[5], (4 * hidden_dim, hidden_dim)),
        "b_ih_l1": u(keys[6], (4 * hidden_dim,)),
        "b_hh_l1": u(keys[7], (4 * hidden_dim,)),
        "fc_w": u(keys[8], (output_dim, hidden_dim)),
        "fc_b": u(keys[9], (output_dim,)),
    }
    return params


def prepare_weights(params):
    """One-time, parameter-only rearrangement (off the per-call hot path).

    Builds:
      wbig   (2H, 8H): fused recurrent block matrix [[whh0, wih1], [0, whh1]],
                       columns grouped [i0 i1 f0 f1 g0 g1 o0 o1], g cols *2.
      wx_big (I, 8H):  layer-0 input-projection weights placed directly in the
                       grouped layout (layer-1 columns zero), g cols *2.
      b_big  (8H,):    both layers' biases in the grouped layout, g cols *2.
      wfc/bfc:         FC weights padded to a 128-lane output slab.
    """
    H = HIDDEN_DIM
    f32 = jnp.float32

    wih0 = params["w_ih_l0"].T.astype(f32)                       # (I, 4H)
    whh0 = params["w_hh_l0"].T.astype(f32)                       # (H, 4H)
    b0 = (params["b_ih_l0"] + params["b_hh_l0"]).astype(f32)     # (4H,)
    wih1 = params["w_ih_l1"].T.astype(f32)                       # (H, 4H)
    whh1 = params["w_hh_l1"].T.astype(f32)                       # (H, 4H)
    b1 = (params["b_ih_l1"] + params["b_hh_l1"]).astype(f32)     # (4H,)

    I = wih0.shape[0]

    def gblk(a, k):                       # gate block k (PyTorch i,f,g,o order)
        return a[..., k * H:(k + 1) * H]

    zH = jnp.zeros((H, H), f32)
    zI = jnp.zeros((I, H), f32)

    wbig_cols, wx_cols, b_cols = [], [], []
    for k in range(4):
        s = 2.0 if k == 2 else 1.0        # pre-scale g gate: tanh(x)=2*sigmoid(2x)-1
        # layer-0 gate k
        wbig_cols.append(jnp.concatenate([gblk(whh0, k) * s, zH], axis=0))
        wx_cols.append(gblk(wih0, k) * s)
        b_cols.append(gblk(b0, k) * s)
        # layer-1 gate k
        wbig_cols.append(jnp.concatenate([gblk(wih1, k) * s, gblk(whh1, k) * s], axis=0))
        wx_cols.append(zI)
        b_cols.append(gblk(b1, k) * s)

    wbig = jnp.concatenate(wbig_cols, axis=1)                    # (2H, 8H)
    wx_big = jnp.concatenate(wx_cols, axis=1)                    # (I, 8H)
    b_big = jnp.concatenate(b_cols, axis=-1)                     # (8H,)

    wfc = jnp.zeros((H, OUT_PAD), f32).at[:, :OUTPUT_DIM].set(params["fc_w"].T.astype(f32))
    bfc = jnp.zeros((1, OUT_PAD), f32).at[:, :OUTPUT_DIM].set(params["fc_b"].astype(f32)[None, :])

    return {"wx_big": wx_big, "b_big": b_big, "wbig": wbig, "wfc": wfc, "bfc": bfc}


@jax.jit
def lstm_forward(x, prepped):
    """x: (B, T, input_dim) float32 -> (B, output_dim)"""
    B, T, I = x.shape
    f32 = jnp.float32
    B_pad = max(8, ((B + 7) // 8) * 8)   # full f32 sublane tiles; dense vregs & stores

    # (T, B, I) -> pad batch to B_pad and append a zero "row T" whose projection
    # becomes the bias-only addend consumed by the fused epilogue iteration.
    x_tm = jnp.transpose(x, (1, 0, 2)).astype(f32)
    x_tm = jnp.pad(x_tm, ((0, 1), (0, B_pad - B), (0, 0)))       # (T+1, B_pad, I)

    # Layer-0 input projection for ALL timesteps, directly in the grouped &
    # g-prescaled layout (biases of both layers folded in).  One matmul + add,
    # hoisted off the recurrent critical path; no per-call regrouping concats.
    addend = (jnp.einsum("tbi,ih->tbh", x_tm, prepped["wx_big"],
                         precision=lax.Precision.HIGHEST)
              + prepped["b_big"][None, None, :])                 # (T+1, B_pad, 8H)

    # Everything (<200 KB) pinned in VMEM; no grid needed at these sizes.
    # TODO(synk): for large B add a batch-tile grid (dimension_semantics=
    # ("parallel",)) for v7x's 2 TCs; for long T stream `addend` via a T-grid
    # BlockSpec instead of pinning it.
    vmem = pl.BlockSpec(memory_space=pltpu.MemorySpace.VMEM)
    out_full = pl.pallas_call(
        _lstm_kernel,
        out_shape=jax.ShapeDtypeStruct((B_pad, OUT_PAD), f32),
        in_specs=[vmem] * 4,
        out_specs=vmem,
    )(addend, prepped["wbig"], prepped["wfc"], prepped["bfc"])
    return out_full[:B, :OUTPUT_DIM]


def lstm_reference(x, params):
    """Pure-JAX reference for correctness checking (PyTorch semantics)."""
    B, T, I = x.shape
    H = HIDDEN_DIM

    def cell(x_in, h, c, wih, whh, bih, bhh):
        g = x_in @ wih.T + h @ whh.T + bih + bhh
        i = jax.nn.sigmoid(g[:, 0 * H:1 * H])
        f = jax.nn.sigmoid(g[:, 1 * H:2 * H])
        gg = jnp.tanh(g[:, 2 * H:3 * H])
        o = jax.nn.sigmoid(g[:, 3 * H:4 * H])
        c = f * c + i * gg
        h = o * jnp.tanh(c)
        return h, c

    h0 = c0 = h1 = c1 = jnp.zeros((B, H), jnp.float32)
    for t in range(T):
        h0, c0 = cell(x[:, t, :], h0, c0, params["w_ih_l0"], params["w_hh_l0"],
                      params["b_ih_l0"], params["b_hh_l0"])
        h1, c1 = cell(h0, h1, c1, params["w_ih_l1"], params["w_hh_l1"],
                      params["b_ih_l1"], params["b_hh_l1"])
    return h1 @ params["fc_w"].T + params["fc_b"]


if __name__ == "__main__":
    key = jax.random.PRNGKey(0)
    k_x, k_p = jax.random.split(key)

    B, T = 2, 8
    x = jax.random.normal(k_x, (B, T, INPUT_DIM), jnp.float32)
    params = init_params(k_p)

    prepped = prepare_weights(params)      # one-time weight prep, off the hot path

    out = lstm_forward(x, prepped)
    out = jax.block_until_ready(out)

    ref = lstm_reference(x, params)
    assert out.shape == (B, OUTPUT_DIM), out.shape
    assert jnp.allclose(out, ref, atol=1e-4, rtol=1e-4), (out, ref)

    print("KERNEL_OK")
</pallas_src>

<mosaic_0001>
module attributes {stable_mosaic.version = 11 : i64} {
  func.func @_lstm_kernel(%arg0: memref<9x8x256xf32, #tpu.memory_space<vmem>>, %arg1: memref<64x256xf32, #tpu.memory_space<vmem>>, %arg2: memref<32x128xf32, #tpu.memory_space<vmem>>, %arg3: memref<1x128xf32, #tpu.memory_space<vmem>>, %arg4: memref<8x128xf32, #tpu.memory_space<vmem>>) attributes {dimension_semantics = [], scalar_prefetch = 0 : i64, scratch_operands = 0 : i64, tpu.core_type = #tpu.core_type<tc>} {
    %c0 = arith.constant 0 : index
    %c0_0 = arith.constant 0 : index
    %0 = vector.load %arg1[%c0, %c0_0] : memref<64x256xf32, #tpu.memory_space<vmem>>, vector<64x256xf32>
    %c0_1 = arith.constant 0 : index
    %c0_2 = arith.constant 0 : index
    %c0_3 = arith.constant 0 : index
    %1 = vector.load %arg0[%c0_1, %c0_2, %c0_3] : memref<9x8x256xf32, #tpu.memory_space<vmem>>, vector<1x8x256xf32>
    %2 = vector.shape_cast %1 : vector<1x8x256xf32> to vector<8x256xf32>
    %3 = arith.negf %2 : vector<8x256xf32>
    %4 = math.exp %3 : vector<8x256xf32>
    %cst = arith.constant 1.000000e+00 : f32
    %5 = vector.broadcast %cst : f32 to vector<8x256xf32>
    %6 = arith.addf %5, %4 : vector<8x256xf32>
    %7 = arith.divf %5, %6 : vector<8x256xf32>
    %8 = vector.extract_strided_slice %7 {offsets = [0, 0], sizes = [8, 32], strides = [1, 1]} : vector<8x256xf32> to vector<8x32xf32>
    %9 = vector.extract_strided_slice %7 {offsets = [0, 128], sizes = [8, 32], strides = [1, 1]} : vector<8x256xf32> to vector<8x32xf32>
    %cst_4 = arith.constant 2.000000e+00 : f32
    %10 = vector.broadcast %cst_4 : f32 to vector<8x32xf32>
    %11 = arith.mulf %9, %10 : vector<8x32xf32>
    %cst_5 = arith.constant 1.000000e+00 : f32
    %12 = vector.broadcast %cst_5 : f32 to vector<8x32xf32>
    %13 = arith.subf %11, %12 : vector<8x32xf32>
    %14 = vector.extract_strided_slice %7 {offsets = [0, 192], sizes = [8, 32], strides = [1, 1]} : vector<8x256xf32> to vector<8x32xf32>
    %15 = arith.mulf %8, %13 : vector<8x32xf32>
    %16 = math.tanh %15 : vector<8x32xf32>
    %17 = arith.mulf %14, %16 : vector<8x32xf32>
    %cst_6 = arith.constant 0.000000e+00 : f32
    %18 = vector.broadcast %cst_6 : f32 to vector<8x32xf32>
    %19 = tpu.concatenate %17, %18 in 1 : vector<8x32xf32>, vector<8x32xf32> -> vector<8x64xf32>
    %20 = tpu.concatenate %15, %18 in 1 : vector<8x32xf32>, vector<8x32xf32> -> vector<8x64xf32>
    %cst_7 = arith.constant dense<0.000000e+00> : vector<8x256xf32>
    %21 = tpu.matmul %19, %0, %cst_7 {dimension_numbers = #tpu.dot_dimension_numbers<[1], [0], [0], [1], [0, 0, 1, 1], [], []>} : vector<8x64xf32>, vector<64x256xf32>, vector<8x256xf32> -> vector<8x256xf32>
    %c1 = arith.constant 1 : index
    %c0_8 = arith.constant 0 : index
    %c0_9 = arith.constant 0 : index
    %22 = vector.load %arg0[%c1, %c0_8, %c0_9] : memref<9x8x256xf32, #tpu.memory_space<vmem>>, vector<1x8x256xf32>
    %23 = vector.shape_cast %22 : vector<1x8x256xf32> to vector<8x256xf32>
    %24 = arith.addf %21, %23 : vector<8x256xf32>
    %25 = arith.negf %24 : vector<8x256xf32>
    %26 = math.exp %25 : vector<8x256xf32>
    %cst_10 = arith.constant 1.000000e+00 : f32
    %27 = vector.broadcast %cst_10 : f32 to vector<8x256xf32>
    %28 = arith.addf %27, %26 : vector<8x256xf32>
    %29 = arith.divf %27, %28 : vector<8x256xf32>
    %30 = vector.extract_strided_slice %29 {offsets = [0, 0], sizes = [8, 64], strides = [1, 1]} : vector<8x256xf32> to vector<8x64xf32>
    %31 = vector.extract_strided_slice %29 {offsets = [0, 64], sizes = [8, 64], strides = [1, 1]} : vector<8x256xf32> to vector<8x64xf32>
    %32 = vector.extract_strided_slice %29 {offsets = [0, 128], sizes = [8, 64], strides = [1, 1]} : vector<8x256xf32> to vector<8x64xf32>
    %cst_11 = arith.constant 2.000000e+00 : f32
    %33 = vector.broadcast %cst_11 : f32 to vector<8x64xf32>
    %34 = arith.mulf %32, %33 : vector<8x64xf32>
    %cst_12 = arith.constant 1.000000e+00 : f32
    %35 = vector.broadcast %cst_12 : f32 to vector<8x64xf32>
    %36 = arith.subf %34, %35 : vector<8x64xf32>
    %37 = vector.extract_strided_slice %29 {offsets = [0, 192], sizes = [8, 64], strides = [1, 1]} : vector<8x256xf32> to vector<8x64xf32>
    %38 = arith.mulf %31, %20 : vector<8x64xf32>
    %39 = arith.mulf %30, %36 : vector<8x64xf32>
    %40 = arith.addf %38, %39 : vector<8x64xf32>
    %41 = math.tanh %40 : vector<8x64xf32>
    %42 = arith.mulf %37, %41 : vector<8x64xf32>
    %cst_13 = arith.constant dense<0.000000e+00> : vector<8x256xf32>
    %43 = tpu.matmul %42, %0, %cst_13 {dimension_numbers = #tpu.dot_dimension_numbers<[1], [0], [0], [1], [0, 0, 1, 1], [], []>} : vector<8x64xf32>, vector<64x256xf32>, vector<8x256xf32> -> vector<8x256xf32>
    %c2 = arith.constant 2 : index
    %c0_14 = arith.constant 0 : index
    %c0_15 = arith.constant 0 : index
    %44 = vector.load %arg0[%c2, %c0_14, %c0_15] : memref<9x8x256xf32, #tpu.memory_space<vmem>>, vector<1x8x256xf32>
    %45 = vector.shape_cast %44 : vector<1x8x256xf32> to vector<8x256xf32>
    %46 = arith.addf %43, %45 : vector<8x256xf32>
    %47 = arith.negf %46 : vector<8x256xf32>
    %48 = math.exp %47 : vector<8x256xf32>
    %cst_16 = arith.constant 1.000000e+00 : f32
    %49 = vector.broadcast %cst_16 : f32 to vector<8x256xf32>
    %50 = arith.addf %49, %48 : vector<8x256xf32>
    %51 = arith.divf %49, %50 : vector<8x256xf32>
    %52 = vector.extract_strided_slice %51 {offsets = [0, 0], sizes = [8, 64], strides = [1, 1]} : vector<8x256xf32> to vector<8x64xf32>
    %53 = vector.extract_strided_slice %51 {offsets = [0, 64], sizes = [8, 64], strides = [1, 1]} : vector<8x256xf32> to vector<8x64xf32>
    %54 = vector.extract_strided_slice %51 {offsets = [0, 128], sizes = [8, 64], strides = [1, 1]} : vector<8x256xf32> to vector<8x64xf32>
    %cst_17 = arith.constant 2.000000e+00 : f32
    %55 = vector.broadcast %cst_17 : f32 to vector<8x64xf32>
    %56 = arith.mulf %54, %55 : vector<8x64xf32>
    %cst_18 = arith.constant 1.000000e+00 : f32
    %57 = vector.broadcast %cst_18 : f32 to vector<8x64xf32>
    %58 = arith.subf %56, %57 : vector<8x64xf32>
    %59 = vector.extract_strided_slice %51 {offsets = [0, 192], sizes = [8, 64], strides = [1, 1]} : vector<8x256xf32> to vector<8x64xf32>
    %60 = arith.mulf %53, %40 : vector<8x64xf32>
    %61 = arith.mulf %52, %58 : vector<8x64xf32>
    %62 = arith.addf %60, %61 : vector<8x64xf32>
    %63 = math.tanh %62 : vector<8x64xf32>
    %64 = arith.mulf %59, %63 : vector<8x64xf32>
    %cst_19 = arith.constant dense<0.000000e+00> : vector<8x256xf32>
    %65 = tpu.matmul %64, %0, %cst_19 {dimension_numbers = #tpu.dot_dimension_numbers<[1], [0], [0], [1], [0, 0, 1, 1], [], []>} : vector<8x64xf32>, vector<64x256xf32>, vector<8x256xf32> -> vector<8x256xf32>
    %c3 = arith.constant 3 : index
    %c0_20 = arith.constant 0 : index
    %c0_21 = arith.constant 0 : index
    %66 = vector.load %arg0[%c3, %c0_20, %c0_21] : memref<9x8x256xf32, #tpu.memory_space<vmem>>, vector<1x8x256xf32>
    %67 = vector.shape_cast %66 : vector<1x8x256xf32> to vector<8x256xf32>
    %68 = arith.addf %65, %67 : vector<8x256xf32>
    %69 = arith.negf %68 : vector<8x256xf32>
    %70 = math.exp %69 : vector<8x256xf32>
    %cst_22 = arith.constant 1.000000e+00 : f32
    %71 = vector.broadcast %cst_22 : f32 to vector<8x256xf32>
    %72 = arith.addf %71, %70 : vector<8x256xf32>
    %73 = arith.divf %71, %72 : vector<8x256xf32>
    %74 = vector.extract_strided_slice %73 {offsets = [0, 0], sizes = [8, 64], strides = [1, 1]} : vector<8x256xf32> to vector<8x64xf32>
    %75 = vector.extract_strided_slice %73 {offsets = [0, 64], sizes = [8, 64], strides = [1, 1]} : vector<8x256xf32> to vector<8x64xf32>
    %76 = vector.extract_strided_slice %73 {offsets = [0, 128], sizes = [8, 64], strides = [1, 1]} : vector<8x256xf32> to vector<8x64xf32>
    %cst_23 = arith.constant 2.000000e+00 : f32
    %77 = vector.broadcast %cst_23 : f32 to vector<8x64xf32>
    %78 = arith.mulf %76, %77 : vector<8x64xf32>
    %cst_24 = arith.constant 1.000000e+00 : f32
    %79 = vector.broadcast %cst_24 : f32 to vector<8x64xf32>
    %80 = arith.subf %78, %79 : vector<8x64xf32>
    %81 = vector.extract_strided_slice %73 {offsets = [0, 192], sizes = [8, 64], strides = [1, 1]} : vector<8x256xf32> to vector<8x64xf32>
    %82 = arith.mulf %75, %62 : vector<8x64xf32>
    %83 = arith.mulf %74, %80 : vector<8x64xf32>
    %84 = arith.addf %82, %83 : vector<8x64xf32>
    %85 = math.tanh %84 : vector<8x64xf32>
    %86 = arith.mulf %81, %85 : vector<8x64xf32>
    %cst_25 = arith.constant dense<0.000000e+00> : vector<8x256xf32>
    %87 = tpu.matmul %86, %0, %cst_25 {dimension_numbers = #tpu.dot_dimension_numbers<[1], [0], [0], [1], [0, 0, 1, 1], [], []>} : vector<8x64xf32>, vector<64x256xf32>, vector<8x256xf32> -> vector<8x256xf32>
    %c4 = arith.constant 4 : index
    %c0_26 = arith.constant 0 : index
    %c0_27 = arith.constant 0 : index
    %88 = vector.load %arg0[%c4, %c0_26, %c0_27] : memref<9x8x256xf32, #tpu.memory_space<vmem>>, vector<1x8x256xf32>
    %89 = vector.shape_cast %88 : vector<1x8x256xf32> to vector<8x256xf32>
    %90 = arith.addf %87, %89 : vector<8x256xf32>
    %91 = arith.negf %90 : vector<8x256xf32>
    %92 = math.exp %91 : vector<8x256xf32>
    %cst_28 = arith.constant 1.000000e+00 : f32
    %93 = vector.broadcast %cst_28 : f32 to vector<8x256xf32>
    %94 = arith.addf %93, %92 : vector<8x256xf32>
    %95 = arith.divf %93, %94 : vector<8x256xf32>
    %96 = vector.extract_strided_slice %95 {offsets = [0, 0], sizes = [8, 64], strides = [1, 1]} : vector<8x256xf32> to vector<8x64xf32>
    %97 = vector.extract_strided_slice %95 {offsets = [0, 64], sizes = [8, 64], strides = [1, 1]} : vector<8x256xf32> to vector<8x64xf32>
    %98 = vector.extract_strided_slice %95 {offsets = [0, 128], sizes = [8, 64], strides = [1, 1]} : vector<8x256xf32> to vector<8x64xf32>
    %cst_29 = arith.constant 2.000000e+00 : f32
    %99 = vector.broadcast %cst_29 : f32 to vector<8x64xf32>
    %100 = arith.mulf %98, %99 : vector<8x64xf32>
    %cst_30 = arith.constant 1.000000e+00 : f32
    %101 = vector.broadcast %cst_30 : f32 to vector<8x64xf32>
    %102 = arith.subf %100, %101 : vector<8x64xf32>
    %103 = vector.extract_strided_slice %95 {offsets = [0, 192], sizes = [8, 64], strides = [1, 1]} : vector<8x256xf32> to vector<8x64xf32>
    %104 = arith.mulf %97, %84 : vector<8x64xf32>
    %105 = arith.mulf %96, %102 : vector<8x64xf32>
    %106 = arith.addf %104, %105 : vector<8x64xf32>
    %107 = math.tanh %106 : vector<8x64xf32>
    %108 = arith.mulf %103, %107 : vector<8x64xf32>
    %cst_31 = arith.constant dense<0.000000e+00> : vector<8x256xf32>
    %109 = tpu.matmul %108, %0, %cst_31 {dimension_numbers = #tpu.dot_dimension_numbers<[1], [0], [0], [1], [0, 0, 1, 1], [], []>} : vector<8x64xf32>, vector<64x256xf32>, vector<8x256xf32> -> vector<8x256xf32>
    %c5 = arith.constant 5 : index
    %c0_32 = arith.constant 0 : index
    %c0_33 = arith.constant 0 : index
    %110 = vector.load %arg0[%c5, %c0_32, %c0_33] : memref<9x8x256xf32, #tpu.memory_space<vmem>>, vector<1x8x256xf32>
    %111 = vector.shape_cast %110 : vector<1x8x256xf32> to vector<8x256xf32>
    %112 = arith.addf %109, %111 : vector<8x256xf32>
    %113 = arith.negf %112 : vector<8x256xf32>
    %114 = math.exp %113 : vector<8x256xf32>
    %cst_34 = arith.constant 1.000000e+00 : f32
    %115 = vector.broadcast %cst_34 : f32 to vector<8x256xf32>
    %116 = arith.addf %115, %114 : vector<8x256xf32>
    %117 = arith.divf %115, %116 : vector<8x256xf32>
    %118 = vector.extract_strided_slice %117 {offsets = [0, 0], sizes = [8, 64], strides = [1, 1]} : vector<8x256xf32> to vector<8x64xf32>
    %119 = vector.extract_strided_slice %117 {offsets = [0, 64], sizes = [8, 64], strides = [1, 1]} : vector<8x256xf32> to vector<8x64xf32>
    %120 = vector.extract_strided_slice %117 {offsets = [0, 128], sizes = [8, 64], strides = [1, 1]} : vector<8x256xf32> to vector<8x64xf32>
    %cst_35 = arith.constant 2.000000e+00 : f32
    %121 = vector.broadcast %cst_35 : f32 to vector<8x64xf32>
    %122 = arith.mulf %120, %121 : vector<8x64xf32>
    %cst_36 = arith.constant 1.000000e+00 : f32
    %123 = vector.broadcast %cst_36 : f32 to vector<8x64xf32>
    %124 = arith.subf %122, %123 : vector<8x64xf32>
    %125 = vector.extract_strided_slice %117 {offsets = [0, 192], sizes = [8, 64], strides = [1, 1]} : vector<8x256xf32> to vector<8x64xf32>
    %126 = arith.mulf %119, %106 : vector<8x64xf32>
    %127 = arith.mulf %118, %124 : vector<8x64xf32>
    %128 = arith.addf %126, %127 : vector<8x64xf32>
    %129 = math.tanh %128 : vector<8x64xf32>
    %130 = arith.mulf %125, %129 : vector<8x64xf32>
    %cst_37 = arith.constant dense<0.000000e+00> : vector<8x256xf32>
    %131 = tpu.matmul %130, %0, %cst_37 {dimension_numbers = #tpu.dot_dimension_numbers<[1], [0], [0], [1], [0, 0, 1, 1], [], []>} : vector<8x64xf32>, vector<64x256xf32>, vector<8x256xf32> -> vector<8x256xf32>
    %c6 = arith.constant 6 : index
    %c0_38 = arith.constant 0 : index
    %c0_39 = arith.constant 0 : index
    %132 = vector.load %arg0[%c6, %c0_38, %c0_39] : memref<9x8x256xf32, #tpu.memory_space<vmem>>, vector<1x8x256xf32>
    %133 = vector.shape_cast %132 : vector<1x8x256xf32> to vector<8x256xf32>
    %134 = arith.addf %131, %133 : vector<8x256xf32>
    %135 = arith.negf %134 : vector<8x256xf32>
    %136 = math.exp %135 : vector<8x256xf32>
    %cst_40 = arith.constant 1.000000e+00 : f32
    %137 = vector.broadcast %cst_40 : f32 to vector<8x256xf32>
    %138 = arith.addf %137, %136 : vector<8x256xf32>
    %139 = arith.divf %137, %138 : vector<8x256xf32>
    %140 = vector.extract_strided_slice %139 {offsets = [0, 0], sizes = [8, 64], strides = [1, 1]} : vector<8x256xf32> to vector<8x64xf32>
    %141 = vector.extract_strided_slice %139 {offsets = [0, 64], sizes = [8, 64], strides = [1, 1]} : vector<8x256xf32> to vector<8x64xf32>
    %142 = vector.extract_strided_slice %139 {offsets = [0, 128], sizes = [8, 64], strides = [1, 1]} : vector<8x256xf32> to vector<8x64xf32>
    %cst_41 = arith.constant 2.000000e+00 : f32
    %143 = vector.broadcast %cst_41 : f32 to vector<8x64xf32>
    %144 = arith.mulf %142, %143 : vector<8x64xf32>
    %cst_42 = arith.constant 1.000000e+00 : f32
    %145 = vector.broadcast %cst_42 : f32 to vector<8x64xf32>
    %146 = arith.subf %144, %145 : vector<8x64xf32>
    %147 = vector.extract_strided_slice %139 {offsets = [0, 192], sizes = [8, 64], strides = [1, 1]} : vector<8x256xf32> to vector<8x64xf32>
    %148 = arith.mulf %141, %128 : vector<8x64xf32>
    %149 = arith.mulf %140, %146 : vector<8x64xf32>
    %150 = arith.addf %148, %149 : vector<8x64xf32>
    %151 = math.tanh %150 : vector<8x64xf32>
    %152 = arith.mulf %147, %151 : vector<8x64xf32>
    %cst_43 = arith.constant dense<0.000000e+00> : vector<8x256xf32>
    %153 = tpu.matmul %152, %0, %cst_43 {dimension_numbers = #tpu.dot_dimension_numbers<[1], [0], [0], [1], [0, 0, 1, 1], [], []>} : vector<8x64xf32>, vector<64x256xf32>, vector<8x256xf32> -> vector<8x256xf32>
    %c7 = arith.constant 7 : index
    %c0_44 = arith.constant 0 : index
    %c0_45 = arith.constant 0 : index
    %154 = vector.load %arg0[%c7, %c0_44, %c0_45] : memref<9x8x256xf32, #tpu.memory_space<vmem>>, vector<1x8x256xf32>
    %155 = vector.shape_cast %154 : vector<1x8x256xf32> to vector<8x256xf32>
    %156 = arith.addf %153, %155 : vector<8x256xf32>
    %157 = arith.negf %156 : vector<8x256xf32>
    %158 = math.exp %157 : vector<8x256xf32>
    %cst_46 = arith.constant 1.000000e+00 : f32
    %159 = vector.broadcast %cst_46 : f32 to vector<8x256xf32>
    %160 = arith.addf %159, %158 : vector<8x256xf32>
    %161 = arith.divf %159, %160 : vector<8x256xf32>
    %162 = vector.extract_strided_slice %161 {offsets = [0, 0], sizes = [8, 64], strides = [1, 1]} : vector<8x256xf32> to vector<8x64xf32>
    %163 = vector.extract_strided_slice %161 {offsets = [0, 64], sizes = [8, 64], strides = [1, 1]} : vector<8x256xf32> to vector<8x64xf32>
    %164 = vector.extract_strided_slice %161 {offsets = [0, 128], sizes = [8, 64], strides = [1, 1]} : vector<8x256xf32> to vector<8x64xf32>
    %cst_47 = arith.constant 2.000000e+00 : f32
    %165 = vector.broadcast %cst_47 : f32 to vector<8x64xf32>
    %166 = arith.mulf %164, %165 : vector<8x64xf32>
    %cst_48 = arith.constant 1.000000e+00 : f32
    %167 = vector.broadcast %cst_48 : f32 to vector<8x64xf32>
    %168 = arith.subf %166, %167 : vector<8x64xf32>
    %169 = vector.extract_strided_slice %161 {offsets = [0, 192], sizes = [8, 64], strides = [1, 1]} : vector<8x256xf32> to vector<8x64xf32>
    %170 = arith.mulf %163, %150 : vector<8x64xf32>
    %171 = arith.mulf %162, %168 : vector<8x64xf32>
    %172 = arith.addf %170, %171 : vector<8x64xf32>
    %173 = math.tanh %172 : vector<8x64xf32>
    %174 = arith.mulf %169, %173 : vector<8x64xf32>
    %cst_49 = arith.constant dense<0.000000e+00> : vector<8x256xf32>
    %175 = tpu.matmul %174, %0, %cst_49 {dimension_numbers = #tpu.dot_dimension_numbers<[1], [0], [0], [1], [0, 0, 1, 1], [], []>} : vector<8x64xf32>, vector<64x256xf32>, vector<8x256xf32> -> vector<8x256xf32>
    %c8 = arith.constant 8 : index
    %c0_50 = arith.constant 0 : index
    %c0_51 = arith.constant 0 : index
    %176 = vector.load %arg0[%c8, %c0_50, %c0_51] : memref<9x8x256xf32, #tpu.memory_space<vmem>>, vector<1x8x256xf32>
    %177 = vector.shape_cast %176 : vector<1x8x256xf32> to vector<8x256xf32>
    %178 = arith.addf %175, %177 : vector<8x256xf32>
    %179 = arith.negf %178 : vector<8x256xf32>
    %180 = math.exp %179 : vector<8x256xf32>
    %cst_52 = arith.constant 1.000000e+00 : f32
    %181 = vector.broadcast %cst_52 : f32 to vector<8x256xf32>
    %182 = arith.addf %181, %180 : vector<8x256xf32>
    %183 = arith.divf %181, %182 : vector<8x256xf32>
    %184 = vector.extract_strided_slice %183 {offsets = [0, 0], sizes = [8, 64], strides = [1, 1]} : vector<8x256xf32> to vector<8x64xf32>
    %185 = vector.extract_strided_slice %183 {offsets = [0, 64], sizes = [8, 64], strides = [1, 1]} : vector<8x256xf32> to vector<8x64xf32>
    %186 = vector.extract_strided_slice %183 {offsets = [0, 128], sizes = [8, 64], strides = [1, 1]} : vector<8x256xf32> to vector<8x64xf32>
    %cst_53 = arith.constant 2.000000e+00 : f32
    %187 = vector.broadcast %cst_53 : f32 to vector<8x64xf32>
    %188 = arith.mulf %186, %187 : vector<8x64xf32>
    %cst_54 = arith.constant 1.000000e+00 : f32
    %189 = vector.broadcast %cst_54 : f32 to vector<8x64xf32>
    %190 = arith.subf %188, %189 : vector<8x64xf32>
    %191 = vector.extract_strided_slice %183 {offsets = [0, 192], sizes = [8, 64], strides = [1, 1]} : vector<8x256xf32> to vector<8x64xf32>
    %192 = arith.mulf %185, %172 : vector<8x64xf32>
    %193 = arith.mulf %184, %190 : vector<8x64xf32>
    %194 = arith.addf %192, %193 : vector<8x64xf32>
    %195 = math.tanh %194 : vector<8x64xf32>
    %196 = arith.mulf %191, %195 : vector<8x64xf32>
    %197 = vector.extract_strided_slice %196 {offsets = [0, 32], sizes = [8, 32], strides = [1, 1]} : vector<8x64xf32> to vector<8x32xf32>
    %c0_55 = arith.constant 0 : index
    %c0_56 = arith.constant 0 : index
    %198 = vector.load %arg2[%c0_55, %c0_56] : memref<32x128xf32, #tpu.memory_space<vmem>>, vector<32x128xf32>
    %cst_57 = arith.constant dense<0.000000e+00> : vector<8x128xf32>
    %199 = tpu.matmul %197, %198, %cst_57 {dimension_numbers = #tpu.dot_dimension_numbers<[1], [0], [0], [1], [0, 0, 1, 1], [], []>} : vector<8x32xf32>, vector<32x128xf32>, vector<8x128xf32> -> vector<8x128xf32>
    %c0_58 = arith.constant 0 : index
    %c0_59 = arith.constant 0 : index
    %200 = vector.load %arg3[%c0_58, %c0_59] : memref<1x128xf32, #tpu.memory_space<vmem>>, vector<1x128xf32>
    %201 = vector.broadcast %200 : vector<1x128xf32> to vector<8x128xf32>
    %202 = arith.addf %199, %201 : vector<8x128xf32>
    %c0_60 = arith.constant 0 : index
    %c0_61 = arith.constant 0 : index
    %203 = vector.load %arg4[%c0_60, %c0_61] : memref<8x128xf32, #tpu.memory_space<vmem>>, vector<8x128xf32>
    tpu.vector_store %arg4[%c0_60, %c0_61], %202 {strides = array<i32>} : memref<8x128xf32, #tpu.memory_space<vmem>>, vector<8x128xf32>,
    return
  }
}

</mosaic_0001>

<llo_original>
// kernel: lstm_forward.1
$region0: #{lstm_forward.1}
  #allocation0 [shape = 'u32[]', space=smem, size = 0x4, offset = 0x4, fixed_abs, tag = 'smem constant byte address 0x4 - core index']
  #allocation1 [shape = 'u32[144,128]{1,0:T(1,128)}', space=vmem, size = 0x12000, scoped, tag = 'internal scratch']
  %s0 = inlined_call_operand.vmem [shape: f32[9,8,256], index: 0, kind: input, shape index: {}]
  %s1 = inlined_call_operand.vmem [shape: f32[64,256], index: 1, kind: input, shape index: {}]
  %s2 = inlined_call_operand.vmem [shape: f32[32,128], index: 2, kind: input, shape index: {}]
  %s3 = inlined_call_operand.vmem [shape: f32[1,128], index: 3, kind: input, shape index: {}]
  %s4 = inlined_call_operand.vmem [shape: f32[8,128], index: 4, kind: output, shape index: {}]
  %s5 = sld [smem:[#allocation0]]
  $region26: #{lstm_forward.1} parent=0
    _
  %s7 = ssub.s32 1, %s5
  %s8 = scalar_select 0, %s7, %s5
  // Predicated region
  $region2: #{lstm_forward.1} parent=0 // pred_check
    _
  $region3: #{lstm_forward.1} parent=0 // pred_check_branch
    %10 = sbr.rel (0) target = $region5
  $region4: #{lstm_forward.1} parent=0 // pred_region
    _
  $region5: #{lstm_forward.1} parent=0 // pred_fallthru
    _
  // Predicated region
  $region6: #{lstm_forward.1} parent=0 // pred_check
    _
  $region7: #{lstm_forward.1} parent=0 // pred_check_branch
    %12 = sbr.rel (0) target = $region9
  $region8: #{lstm_forward.1} parent=0 // pred_region
    _
  $region9: #{lstm_forward.1} parent=0 // pred_fallthru
    _
  // Predicated region
  $region10: #{lstm_forward.1} parent=0 // pred_check
    _
  $region11: #{lstm_forward.1} parent=0 // pred_check_branch
    %14 = sbr.rel (0) target = $region13
  $region12: #{lstm_forward.1} parent=0 // pred_region
    _
  $region13: #{lstm_forward.1} parent=0 // pred_fallthru
    _
  // Predicated region
  $region14: #{lstm_forward.1} parent=0 // pred_check
    _
  $region15: #{lstm_forward.1} parent=0 // pred_check_branch
    %16 = sbr.rel (0) target = $region17
  $region16: #{lstm_forward.1} parent=0 // pred_region
    _
  $region17: #{lstm_forward.1} parent=0 // pred_fallthru
    _
  %v17 = vld [vmem:[%s1] sm:$0xff]
  %v18 = vld [vmem:[%s1 + $0x8] sm:$0xff]
  %v19 = vld [vmem:[%s1 + $0x10] sm:$0xff]
  %v20 = vld [vmem:[%s1 + $0x18] sm:$0xff]
  %v21 = vld [vmem:[%s1 + $0x20] sm:$0xff]
  %v22 = vld [vmem:[%s1 + $0x28] sm:$0xff]
  %v23 = vld [vmem:[%s1 + $0x30] sm:$0xff]
  %v24 = vld [vmem:[%s1 + $0x38] sm:$0xff]
  %v25 = vld [vmem:[%s1 + $0x40] sm:$0xff]
  %v26 = vld [vmem:[%s1 + $0x48] sm:$0xff]
  %v27 = vld [vmem:[%s1 + $0x50] sm:$0xff]
  %v28 = vld [vmem:[%s1 + $0x58] sm:$0xff]
  %v29 = vld [vmem:[%s1 + $0x60] sm:$0xff]
  %v30 = vld [vmem:[%s1 + $0x68] sm:$0xff]
  %v31 = vld [vmem:[%s1 + $0x70] sm:$0xff]
  %v32 = vld [vmem:[%s1 + $0x78] sm:$0xff]
  %v33 = vld [vmem:[%s0] sm:$0xff]
  %v34 = vld [vmem:[%s0 + $0x8] sm:$0xff]
  %v35 = vxor.u32 %v33, 2147483648
  %v36 = vxor.u32 %v34, 2147483648
  %v37 = vmul.f32 %v35, 1.442695
  %v38 = vpow.pop %v37
  %v39 = vmul.f32 %v36, 1.442695
  %v40 = vpow.pop %v39
  %v41 = vadd.f32 %v38, 1.0
  %v42 = vadd.f32 %v40, 1.0
  %v43 = vrcp.pop %v41
  %v44 = vmul.f32 1.0, %v43
  %v45 = vrcp.pop %v42
  %v46 = vmul.f32 1.0, %v45
  %v47 = vmul.f32 %v46, 2.0
  %v48 = vsub.f32 %v47, 1.0
  %v49 = vmul.f32 %v44, %v48
  %v50 = vtanh.pop %v49
  %52 = vrot.lane.b32.xlu0 %v50, 64
  %v53 = vpop.permute.xlu0 %52
  %v55 = vmul.f32 %v46, %v53
  %57 = vrot.lane.b32.xlu0 %v55, 64
  %v58 = vpop.permute.xlu0 %57
  %vm60 = vcmask 261120
  %v61 = vsel %vm60, %v58, 0.0
  %v62 = vsel %vm60, %v49, 0.0
  %s63 = scalar_lea.vmem %s0, 16
  %v64 = vld [vmem:[%s63] sm:$0xff]
  %v65 = vld [vmem:[%s63 + $0x8] sm:$0xff]
  %vm66 = vcmask 523264
  %v68 = vsel %vm66, %v61, 0
  %70 = vmatprep.subr.mxu0 %v18
  %71 = vmatpush1.msra.mxu0 %v17
  %72 = vmatprep.subr.mxu0 %v20
  %73 = vmatpush1.msra.mxu0 %v19
  %74 = vmatprep.subr.mxu0 %v22
  %75 = vmatpush1.msra.mxu0 %v21
  %76 = vmatprep.subr.mxu0 %v24
  %77 = vmatpush1.msra.mxu0 %v23
  %78 = vmatprep.subr.mxu0 %v26
  %79 = vmatpush1.msra.mxu0 %v25
  %80 = vmatprep.subr.mxu0 %v28
  %81 = vmatpush1.msra.mxu0 %v27
  %82 = vmatprep.subr.mxu0 %v30
  %83 = vmatpush1.msra.mxu0 %v29
  %84 = vmatprep.subr.mxu0 %v32
  %85 = vmatpush1.msra.mxu0 %v31
  %86 = vmatprep.subr.mxu0 0.0
  %87 = vmatpush1.msra.mxu0 0.0
  %88 = vmatprep.subr.mxu0 0.0
  %89 = vmatpush1.msra.mxu0 0.0
  %90 = vmatprep.subr.mxu0 0.0
  %91 = vmatpush1.msra.mxu0 0.0
  %92 = vmatprep.subr.mxu0 0.0
  %93 = vmatpush1.msra.mxu0 0.0
  %94 = vmatprep.subr.mxu0 0.0
  %95 = vmatpush1.msra.mxu0 0.0
  %96 = vmatprep.subr.mxu0 0.0
  %97 = vmatpush1.msra.mxu0 0.0
  %98 = vmatprep.subr.mxu0 0.0
  %99 = vmatpush1.msra.mxu0 0.0
  %100 = vmatprep.subr.mxu0 0.0
  %101 = vmatpush1.msra.mxu0 0.0
  %102 = vmatprep.subr.mxu0 0.0
  %103 = vmatpush1.msra.mxu0 0.0
  %104 = vmatprep.subr.mxu0 0.0
  %105 = vmatpush1.msra.mxu0 0.0
  %106 = vmatprep.subr.mxu0 0.0
  %107 = vmatpush1.msra.mxu0 0.0
  %108 = vmatprep.subr.mxu0 0.0
  %109 = vmatpush1.msra.mxu0 0.0
  %110 = vmatprep.subr.mxu0 0.0
  %111 = vmatpush1.msra.mxu0 0.0
  %112 = vmatprep.subr.mxu0 0.0
  %113 = vmatpush1.msra.mxu0 0.0
  %114 = vmatprep.subr.mxu0 0.0
  %115 = vmatpush1.msra.mxu0 0.0
  %116 = vmatprep.subr.mxu0 0.0
  %117 = vmatpush1.msra.mxu0 0.0
  %118 = vmatprep.subr.mxu0 0.0
  %119 = vmatpush1.msra.mxu0 0.0
  %120 = vmatprep.subr.mxu0 0.0
  %121 = vmatpush1.msra.mxu0 0.0
  %122 = vmatprep.subr.mxu0 0.0
  %123 = vmatpush1.msra.mxu0 0.0
  %124 = vmatprep.subr.mxu0 0.0
  %125 = vmatpush1.msra.mxu0 0.0
  %126 = vmatprep.subr.mxu0 0.0
  %127 = vmatpush1.msra.mxu0 0.0
  %128 = vmatprep.subr.mxu0 0.0
  %129 = vmatpush1.msra.mxu0 0.0
  %130 = vmatprep.subr.mxu0 0.0
  %131 = vmatpush1.msra.mxu0 0.0
  %132 = vmatprep.subr.mxu0 0.0
  %133 = vmatpush1.msra.mxu0 0.0
  %134 = vmatprep.mubr.f32.mxu0 0.0
  %135 = vmatmul.mubr.f32.gmra.mrb[0].mxu0 %v68
  %v136 = vpop.f32.mrb[0].mxu0
  %v137 = vadd.f32 %v64, %v136
  %v138 = vpop.f32.mrb[0].mxu0
  %v139 = vadd.f32 %v65, %v138
  %140 = vdwg.mxu0
  %v141 = vxor.u32 %v137, 2147483648
  %v142 = vxor.u32 %v139, 2147483648
  %v143 = vmul.f32 %v141, 1.442695
  %v144 = vpow.pop %v143
  %v145 = vmul.f32 %v142, 1.442695
  %v146 = vpow.pop %v145
  %v147 = vadd.f32 %v144, 1.0
  %v148 = vadd.f32 %v146, 1.0
  %v149 = vrcp.pop %v147
  %v150 = vmul.f32 1.0, %v149
  %v151 = vrcp.pop %v148
  %v152 = vmul.f32 1.0, %v151
  %v153 = vmul.f32 %v152, 2.0
  %v154 = vsub.f32 %v153, 1.0
  %156 = vrot.lane.b32.xlu0 %v62, 64
  %v157 = vpop.permute.xlu0 %156
  %v159 = vmul.f32 %v150, %v157
  %v160 = vmul.f32 %v150, %v154
  %162 = vrot.lane.b32.xlu0 %v160, 64
  %v163 = vpop.permute.xlu0 %162
  %v165 = vadd.f32 %v159, %v163
  %v166 = vtanh.pop %v165
  %v167 = vmul.f32 %v152, %v166
  %s168 = scalar_lea.vmem %s0, 32
  %v169 = vld [vmem:[%s168] sm:$0xff]
  %v170 = vld [vmem:[%s168 + $0x8] sm:$0xff]
  %172 = vrot.lane.b32.xlu0 %v167, 64
  %v173 = vpop.permute.xlu0 %172
  %v174 = vsel %vm66, %v173, 0
  %176 = vmatprep.subr.mxu0 %v18
  %177 = vmatpush1.msra.mxu0 %v17
  %178 = vmatprep.subr.mxu0 %v20
  %179 = vmatpush1.msra.mxu0 %v19
  %180 = vmatprep.subr.mxu0 %v22
  %181 = vmatpush1.msra.mxu0 %v21
  %182 = vmatprep.subr.mxu0 %v24
  %183 = vmatpush1.msra.mxu0 %v23
  %184 = vmatprep.subr.mxu0 %v26
  %185 = vmatpush1.msra.mxu0 %v25
  %186 = vmatprep.subr.mxu0 %v28
  %187 = vmatpush1.msra.mxu0 %v27
  %188 = vmatprep.subr.mxu0 %v30
  %189 = vmatpush1.msra.mxu0 %v29
  %190 = vmatprep.subr.mxu0 %v32
  %191 = vmatpush1.msra.mxu0 %v31
  %192 = vmatprep.subr.mxu0 0.0
  %193 = vmatpush1.msra.mxu0 0.0
  %194 = vmatprep.subr.mxu0 0.0
  %195 = vmatpush1.msra.mxu0 0.0
  %196 = vmatprep.subr.mxu0 0.0
  %197 = vmatpush1.msra.mxu0 0.0
  %198 = vmatprep.subr.mxu0 0.0
  %199 = vmatpush1.msra.mxu0 0.0
  %200 = vmatprep.subr.mxu0 0.0
  %201 = vmatpush1.msra.mxu0 0.0
  %202 = vmatprep.subr.mxu0 0.0
  %203 = vmatpush1.msra.mxu0 0.0
  %204 = vmatprep.subr.mxu0 0.0
  %205 = vmatpush1.msra.mxu0 0.0
  %206 = vmatprep.subr.mxu0 0.0
  %207 = vmatpush1.msra.mxu0 0.0
  %208 = vmatprep.subr.mxu0 0.0
  %209 = vmatpush1.msra.mxu0 0.0
  %210 = vmatprep.subr.mxu0 0.0
  %211 = vmatpush1.msra.mxu0 0.0
  %212 = vmatprep.subr.mxu0 0.0
  %213 = vmatpush1.msra.mxu0 0.0
  %214 = vmatprep.subr.mxu0 0.0
  %215 = vmatpush1.msra.mxu0 0.0
  %216 = vmatprep.subr.mxu0 0.0
  %217 = vmatpush1.msra.mxu0 0.0
  %218 = vmatprep.subr.mxu0 0.0
  %219 = vmatpush1.msra.mxu0 0.0
  %220 = vmatprep.subr.mxu0 0.0
  %221 = vmatpush1.msra.mxu0 0.0
  %222 = vmatprep.subr.mxu0 0.0
  %223 = vmatpush1.msra.mxu0 0.0
  %224 = vmatprep.subr.mxu0 0.0
  %225 = vmatpush1.msra.mxu0 0.0
  %226 = vmatprep.subr.mxu0 0.0
  %227 = vmatpush1.msra.mxu0 0.0
  %228 = vmatprep.subr.mxu0 0.0
  %229 = vmatpush1.msra.mxu0 0.0
  %230 = vmatprep.subr.mxu0 0.0
  %231 = vmatpush1.msra.mxu0 0.0
  %232 = vmatprep.subr.mxu0 0.0
  %233 = vmatpush1.msra.mxu0 0.0
  %234 = vmatprep.subr.mxu0 0.0
  %235 = vmatpush1.msra.mxu0 0.0
  %236 = vmatprep.subr.mxu0 0.0
  %237 = vmatpush1.msra.mxu0 0.0
  %238 = vmatprep.subr.mxu0 0.0
  %239 = vmatpush1.msra.mxu0 0.0
  %240 = vmatprep.mubr.f32.mxu0 0.0
  %241 = vmatmul.mubr.f32.gmra.mrb[0].mxu0 %v174
  %v242 = vpop.f32.mrb[0].mxu0
  %v243 = vadd.f32 %v169, %v242
  %v244 = vpop.f32.mrb[0].mxu0
  %v245 = vadd.f32 %v170, %v244
  %246 = vdwg.mxu0
  %v247 = vxor.u32 %v243, 2147483648
  %v248 = vxor.u32 %v245, 2147483648
  %v249 = vmul.f32 %v247, 1.442695
  %v250 = vpow.pop %v249
  %v251 = vmul.f32 %v248, 1.442695
  %v252 = vpow.pop %v251
  %v253 = vadd.f32 %v250, 1.0
  %v254 = vadd.f32 %v252, 1.0
  %v255 = vrcp.pop %v253
  %v256 = vmul.f32 1.0, %v255
  %v257 = vrcp.pop %v254
  %v258 = vmul.f32 1.0, %v257
  %v259 = vmul.f32 %v258, 2.0
  %v260 = vsub.f32 %v259, 1.0
  %v261 = vmul.f32 %v256, %v165
  %v262 = vmul.f32 %v256, %v260
  %264 = vrot.lane.b32.xlu0 %v262, 64
  %v265 = vpop.permute.xlu0 %264
  %v267 = vadd.f32 %v261, %v265
  %v268 = vtanh.pop %v267
  %v269 = vmul.f32 %v258, %v268
  %s270 = scalar_lea.vmem %s0, 48
  %v271 = vld [vmem:[%s270] sm:$0xff]
  %v272 = vld [vmem:[%s270 + $0x8] sm:$0xff]
  %274 = vrot.lane.b32.xlu0 %v269, 64
  %v275 = vpop.permute.xlu0 %274
  %v276 = vsel %vm66, %v275, 0
  %278 = vmatprep.subr.mxu0 %v18
  %279 = vmatpush1.msra.mxu0 %v17
  %280 = vmatprep.subr.mxu0 %v20
  %281 = vmatpush1.msra.mxu0 %v19
  %282 = vmatprep.subr.mxu0 %v22
  %283 = vmatpush1.msra.mxu0 %v21
  %284 = vmatprep.subr.mxu0 %v24
  %285 = vmatpush1.msra.mxu0 %v23
  %286 = vmatprep.subr.mxu0 %v26
  %287 = vmatpush1.msra.mxu0 %v25
  %288 = vmatprep.subr.mxu0 %v28
  %289 = vmatpush1.msra.mxu0 %v27
  %290 = vmatprep.subr.mxu0 %v30
  %291 = vmatpush1.msra.mxu0 %v29
  %292 = vmatprep.subr.mxu0 %v32
  %293 = vmatpush1.msra.mxu0 %v31
  %294 = vmatprep.subr.mxu0 0.0
  %295 = vmatpush1.msra.mxu0 0.0
  %296 = vmatprep.subr.mxu0 0.0
  %297 = vmatpush1.msra.mxu0 0.0
  %298 = vmatprep.subr.mxu0 0.0
  %299 = vmatpush1.msra.mxu0 0.0
  %300 = vmatprep.subr.mxu0 0.0
  %301 = vmatpush1.msra.mxu0 0.0
  %302 = vmatprep.subr.mxu0 0.0
  %303 = vmatpush1.msra.mxu0 0.0
  %304 = vmatprep.subr.mxu0 0.0
  %305 = vmatpush1.msra.mxu0 0.0
  %306 = vmatprep.subr.mxu0 0.0
  %307 = vmatpush1.msra.mxu0 0.0
  %308 = vmatprep.subr.mxu0 0.0
  %309 = vmatpush1.msra.mxu0 0.0
  %310 = vmatprep.subr.mxu0 0.0
  %311 = vmatpush1.msra.mxu0 0.0
  %312 = vmatprep.subr.mxu0 0.0
  %313 = vmatpush1.msra.mxu0 0.0
  %314 = vmatprep.subr.mxu0 0.0
  %315 = vmatpush1.msra.mxu0 0.0
  %316 = vmatprep.subr.mxu0 0.0
  %317 = vmatpush1.msra.mxu0 0.0
  %318 = vmatprep.subr.mxu0 0.0
  %319 = vmatpush1.msra.mxu0 0.0
  %320 = vmatprep.subr.mxu0 0.0
  %321 = vmatpush1.msra.mxu0 0.0
  %322 = vmatprep.subr.mxu0 0.0
  %323 = vmatpush1.msra.mxu0 0.0
  %324 = vmatprep.subr.mxu0 0.0
  %325 = vmatpush1.msra.mxu0 0.0
  %326 = vmatprep.subr.mxu0 0.0
  %327 = vmatpush1.msra.mxu0 0.0
  %328 = vmatprep.subr.mxu0 0.0
  %329 = vmatpush1.msra.mxu0 0.0
  %330 = vmatprep.subr.mxu0 0.0
  %331 = vmatpush1.msra.mxu0 0.0
  %332 = vmatprep.subr.mxu0 0.0
  %333 = vmatpush1.msra.mxu0 0.0
  %334 = vmatprep.subr.mxu0 0.0
  %335 = vmatpush1.msra.mxu0 0.0
  %336 = vmatprep.subr.mxu0 0.0
  %337 = vmatpush1.msra.mxu0 0.0
  %338 = vmatprep.subr.mxu0 0.0
  %339 = vmatpush1.msra.mxu0 0.0
  %340 = vmatprep.subr.mxu0 0.0
  %341 = vmatpush1.msra.mxu0 0.0
  %342 = vmatprep.mubr.f32.mxu0 0.0
  %343 = vmatmul.mubr.f32.gmra.mrb[0].mxu0 %v276
  %v344 = vpop.f32.mrb[0].mxu0
  %v345 = vadd.f32 %v271, %v344
  %v346 = vpop.f32.mrb[0].mxu0
  %v347 = vadd.f32 %v272, %v346
  %348 = vdwg.mxu0
  %v349 = vxor.u32 %v345, 2147483648
  %v350 = vxor.u32 %v347, 2147483648
  %v351 = vmul.f32 %v349, 1.442695
  %v352 = vpow.pop %v351
  %v353 = vmul.f32 %v350, 1.442695
  %v354 = vpow.pop %v353
  %v355 = vadd.f32 %v352, 1.0
  %v356 = vadd.f32 %v354, 1.0
  %v357 = vrcp.pop %v355
  %v358 = vmul.f32 1.0, %v357
  %v359 = vrcp.pop %v356
  %v360 = vmul.f32 1.0, %v359
  %v361 = vmul.f32 %v360, 2.0
  %v362 = vsub.f32 %v361, 1.0
  %v363 = vmul.f32 %v358, %v267
  %v364 = vmul.f32 %v358, %v362
  %366 = vrot.lane.b32.xlu0 %v364, 64
  %v367 = vpop.permute.xlu0 %366
  %v369 = vadd.f32 %v363, %v367
  %v370 = vtanh.pop %v369
  %v371 = vmul.f32 %v360, %v370
  %s372 = scalar_lea.vmem %s0, 64
  %v373 = vld [vmem:[%s372] sm:$0xff]
  %v374 = vld [vmem:[%s372 + $0x8] sm:$0xff]
  %376 = vrot.lane.b32.xlu0 %v371, 64
  %v377 = vpop.permute.xlu0 %376
  %v378 = vsel %vm66, %v377, 0
  %380 = vmatprep.subr.mxu0 %v18
  %381 = vmatpush1.msra.mxu0 %v17
  %382 = vmatprep.subr.mxu0 %v20
  %383 = vmatpush1.msra.mxu0 %v19
  %384 = vmatprep.subr.mxu0 %v22
  %385 = vmatpush1.msra.mxu0 %v21
  %386 = vmatprep.subr.mxu0 %v24
  %387 = vmatpush1.msra.mxu0 %v23
  %388 = vmatprep.subr.mxu0 %v26
  %389 = vmatpush1.msra.mxu0 %v25
  %390 = vmatprep.subr.mxu0 %v28
  %391 = vmatpush1.msra.mxu0 %v27
  %392 = vmatprep.subr.mxu0 %v30
  %393 = vmatpush1.msra.mxu0 %v29
  %394 = vmatprep.subr.mxu0 %v32
  %395 = vmatpush1.msra.mxu0 %v31
  %396 = vmatprep.subr.mxu0 0.0
  %397 = vmatpush1.msra.mxu0 0.0
  %398 = vmatprep.subr.mxu0 0.0
  %399 = vmatpush1.msra.mxu0 0.0
  %400 = vmatprep.subr.mxu0 0.0
  %401 = vmatpush1.msra.mxu0 0.0
  %402 = vmatprep.subr.mxu0 0.0
  %403 = vmatpush1.msra.mxu0 0.0
  %404 = vmatprep.subr.mxu0 0.0
  %405 = vmatpush1.msra.mxu0 0.0
  %406 = vmatprep.subr.mxu0 0.0
  %407 = vmatpush1.msra.mxu0 0.0
  %408 = vmatprep.subr.mxu0 0.0
  %409 = vmatpush1.msra.mxu0 0.0
  %410 = vmatprep.subr.mxu0 0.0
  %411 = vmatpush1.msra.mxu0 0.0
  %412 = vmatprep.subr.mxu0 0.0
  %413 = vmatpush1.msra.mxu0 0.0
  %414 = vmatprep.subr.mxu0 0.0
  %415 = vmatpush1.msra.mxu0 0.0
  %416 = vmatprep.subr.mxu0 0.0
  %417 = vmatpush1.msra.mxu0 0.0
  %418 = vmatprep.subr.mxu0 0.0
  %419 = vmatpush1.msra.mxu0 0.0
  %420 = vmatprep.subr.mxu0 0.0
  %421 = vmatpush1.msra.mxu0 0.0
  %422 = vmatprep.subr.mxu0 0.0
  %423 = vmatpush1.msra.mxu0 0.0
  %424 = vmatprep.subr.mxu0 0.0
  %425 = vmatpush1.msra.mxu0 0.0
  %426 = vmatprep.subr.mxu0 0.0
  %427 = vmatpush1.msra.mxu0 0.0
  %428 = vmatprep.subr.mxu0 0.0
  %429 = vmatpush1.msra.mxu0 0.0
  %430 = vmatprep.subr.mxu0 0.0
  %431 = vmatpush1.msra.mxu0 0.0
  %432 = vmatprep.subr.mxu0 0.0
  %433 = vmatpush1.msra.mxu0 0.0
  %434 = vmatprep.subr.mxu0 0.0
  %435 = vmatpush1.msra.mxu0 0.0
  %436 = vmatprep.subr.mxu0 0.0
  %437 = vmatpush1.msra.mxu0 0.0
  %438 = vmatprep.subr.mxu0 0.0
  %439 = vmatpush1.msra.mxu0 0.0
  %440 = vmatprep.subr.mxu0 0.0
  %441 = vmatpush1.msra.mxu0 0.0
  %442 = vmatprep.subr.mxu0 0.0
  %443 = vmatpush1.msra.mxu0 0.0
  %444 = vmatprep.mubr.f32.mxu0 0.0
  %445 = vmatmul.mubr.f32.gmra.mrb[0].mxu0 %v378
  %v446 = vpop.f32.mrb[0].mxu0
  %v447 = vadd.f32 %v373, %v446
  %v448 = vpop.f32.mrb[0].mxu0
  %v449 = vadd.f32 %v374, %v448
  %450 = vdwg.mxu0
  %v451 = vxor.u32 %v447, 2147483648
  %v452 = vxor.u32 %v449, 2147483648
  %v453 = vmul.f32 %v451, 1.442695
  %v454 = vpow.pop %v453
  %v455 = vmul.f32 %v452, 1.442695
  %v456 = vpow.pop %v455
  %v457 = vadd.f32 %v454, 1.0
  %v458 = vadd.f32 %v456, 1.0
  %v459 = vrcp.pop %v457
  %v460 = vmul.f32 1.0, %v459
  %v461 = vrcp.pop %v458
  %v462 = vmul.f32 1.0, %v461
  %v463 = vmul.f32 %v462, 2.0
  %v464 = vsub.f32 %v463, 1.0
  %v465 = vmul.f32 %v460, %v369
  %v466 = vmul.f32 %v460, %v464
  %468 = vrot.lane.b32.xlu0 %v466, 64
  %v469 = vpop.permute.xlu0 %468
  %v471 = vadd.f32 %v465, %v469
  %v472 = vtanh.pop %v471
  %v473 = vmul.f32 %v462, %v472
  %s474 = scalar_lea.vmem %s0, 80
  %v475 = vld [vmem:[%s474] sm:$0xff]
  %v476 = vld [vmem:[%s474 + $0x8] sm:$0xff]
  %478 = vrot.lane.b32.xlu0 %v473, 64
  %v479 = vpop.permute.xlu0 %478
  %v480 = vsel %vm66, %v479, 0
  %482 = vmatprep.subr.mxu0 %v18
  %483 = vmatpush1.msra.mxu0 %v17
  %484 = vmatprep.subr.mxu0 %v20
  %485 = vmatpush1.msra.mxu0 %v19
  %486 = vmatprep.subr.mxu0 %v22
  %487 = vmatpush1.msra.mxu0 %v21
  %488 = vmatprep.subr.mxu0 %v24
  %489 = vmatpush1.msra.mxu0 %v23
  %490 = vmatprep.subr.mxu0 %v26
  %491 = vmatpush1.msra.mxu0 %v25
  %492 = vmatprep.subr.mxu0 %v28
  %493 = vmatpush1.msra.mxu0 %v27
  %494 = vmatprep.subr.mxu0 %v30
  %495 = vmatpush1.msra.mxu0 %v29
  %496 = vmatprep.subr.mxu0 %v32
  %497 = vmatpush1.msra.mxu0 %v31
  %498 = vmatprep.subr.mxu0 0.0
  %499 = vmatpush1.msra.mxu0 0.0
  %500 = vmatprep.subr.mxu0 0.0
  %501 = vmatpush1.msra.mxu0 0.0
  %502 = vmatprep.subr.mxu0 0.0
  %503 = vmatpush1.msra.mxu0 0.0
  %504 = vmatprep.subr.mxu0 0.0
  %505 = vmatpush1.msra.mxu0 0.0
  %506 = vmatprep.subr.mxu0 0.0
  %507 = vmatpush1.msra.mxu0 0.0
  %508 = vmatprep.subr.mxu0 0.0
  %509 = vmatpush1.msra.mxu0 0.0
  %510 = vmatprep.subr.mxu0 0.0
  %511 = vmatpush1.msra.mxu0 0.0
  %512 = vmatprep.subr.mxu0 0.0
  %513 = vmatpush1.msra.mxu0 0.0
  %514 = vmatprep.subr.mxu0 0.0
  %515 = vmatpush1.msra.mxu0 0.0
  %516 = vmatprep.subr.mxu0 0.0
  %517 = vmatpush1.msra.mxu0 0.0
  %518 = vmatprep.subr.mxu0 0.0
  %519 = vmatpush1.msra.mxu0 0.0
  %520 = vmatprep.subr.mxu0 0.0
  %521 = vmatpush1.msra.mxu0 0.0
  %522 = vmatprep.subr.mxu0 0.0
  %523 = vmatpush1.msra.mxu0 0.0
  %524 = vmatprep.subr.mxu0 0.0
  %525 = vmatpush1.msra.mxu0 0.0
  %526 = vmatprep.subr.mxu0 0.0
  %527 = vmatpush1.msra.mxu0 0.0
  %528 = vmatprep.subr.mxu0 0.0
  %529 = vmatpush1.msra.mxu0 0.0
  %530 = vmatprep.subr.mxu0 0.0
  %531 = vmatpush1.msra.mxu0 0.0
  %532 = vmatprep.subr.mxu0 0.0
  %533 = vmatpush1.msra.mxu0 0.0
  %534 = vmatprep.subr.mxu0 0.0
  %535 = vmatpush1.msra.mxu0 0.0
  %536 = vmatprep.subr.mxu0 0.0
  %537 = vmatpush1.msra.mxu0 0.0
  %538 = vmatprep.subr.mxu0 0.0
  %539 = vmatpush1.msra.mxu0 0.0
  %540 = vmatprep.subr.mxu0 0.0
  %541 = vmatpush1.msra.mxu0 0.0
  %542 = vmatprep.subr.mxu0 0.0
  %543 = vmatpush1.msra.mxu0 0.0
  %544 = vmatprep.subr.mxu0 0.0
  %545 = vmatpush1.msra.mxu0 0.0
  %546 = vmatprep.mubr.f32.mxu0 0.0
  %547 = vmatmul.mubr.f32.gmra.mrb[0].mxu0 %v480
  %v548 = vpop.f32.mrb[0].mxu0
  %v549 = vadd.f32 %v475, %v548
  %v550 = vpop.f32.mrb[0].mxu0
  %v551 = vadd.f32 %v476, %v550
  %552 = vdwg.mxu0
  %v553 = vxor.u32 %v549, 2147483648
  %v554 = vxor.u32 %v551, 2147483648
  %v555 = vmul.f32 %v553, 1.442695
  %v556 = vpow.pop %v555
  %v557 = vmul.f32 %v554, 1.442695
  %v558 = vpow.pop %v557
  %v559 = vadd.f32 %v556, 1.0
  %v560 = vadd.f32 %v558, 1.0
  %v561 = vrcp.pop %v559
  %v562 = vmul.f32 1.0, %v561
  %v563 = vrcp.pop %v560
  %v564 = vmul.f32 1.0, %v563
  %v565 = vmul.f32 %v564, 2.0
  %v566 = vsub.f32 %v565, 1.0
  %v567 = vmul.f32 %v562, %v471
  %v568 = vmul.f32 %v562, %v566
  %570 = vrot.lane.b32.xlu0 %v568, 64
  %v571 = vpop.permute.xlu0 %570
  %v573 = vadd.f32 %v567, %v571
  %v574 = vtanh.pop %v573
  %v575 = vmul.f32 %v564, %v574
  %s576 = scalar_lea.vmem %s0, 96
  %v577 = vld [vmem:[%s576] sm:$0xff]
  %v578 = vld [vmem:[%s576 + $0x8] sm:$0xff]
  %580 = vrot.lane.b32.xlu0 %v575, 64
  %v581 = vpop.permute.xlu0 %580
  %v582 = vsel %vm66, %v581, 0
  %584 = vmatprep.subr.mxu0 %v18
  %585 = vmatpush1.msra.mxu0 %v17
  %586 = vmatprep.subr.mxu0 %v20
  %587 = vmatpush1.msra.mxu0 %v19
  %588 = vmatprep.subr.mxu0 %v22
  %589 = vmatpush1.msra.mxu0 %v21
  %590 = vmatprep.subr.mxu0 %v24
  %591 = vmatpush1.msra.mxu0 %v23
  %592 = vmatprep.subr.mxu0 %v26
  %593 = vmatpush1.msra.mxu0 %v25
  %594 = vmatprep.subr.mxu0 %v28
  %595 = vmatpush1.msra.mxu0 %v27
  %596 = vmatprep.subr.mxu0 %v30
  %597 = vmatpush1.msra.mxu0 %v29
  %598 = vmatprep.subr.mxu0 %v32
  %599 = vmatpush1.msra.mxu0 %v31
  %600 = vmatprep.subr.mxu0 0.0
  %601 = vmatpush1.msra.mxu0 0.0
  %602 = vmatprep.subr.mxu0 0.0
  %603 = vmatpush1.msra.mxu0 0.0
  %604 = vmatprep.subr.mxu0 0.0
  %605 = vmatpush1.msra.mxu0 0.0
  %606 = vmatprep.subr.mxu0 0.0
  %607 = vmatpush1.msra.mxu0 0.0
  %608 = vmatprep.subr.mxu0 0.0
  %609 = vmatpush1.msra.mxu0 0.0
  %610 = vmatprep.subr.mxu0 0.0
  %611 = vmatpush1.msra.mxu0 0.0
  %612 = vmatprep.subr.mxu0 0.0
  %613 = vmatpush1.msra.mxu0 0.0
  %614 = vmatprep.subr.mxu0 0.0
  %615 = vmatpush1.msra.mxu0 0.0
  %616 = vmatprep.subr.mxu0 0.0
  %617 = vmatpush1.msra.mxu0 0.0
  %618 = vmatprep.subr.mxu0 0.0
  %619 = vmatpush1.msra.mxu0 0.0
  %620 = vmatprep.subr.mxu0 0.0
  %621 = vmatpush1.msra.mxu0 0.0
  %622 = vmatprep.subr.mxu0 0.0
  %623 = vmatpush1.msra.mxu0 0.0
  %624 = vmatprep.subr.mxu0 0.0
  %625 = vmatpush1.msra.mxu0 0.0
  %626 = vmatprep.subr.mxu0 0.0
  %627 = vmatpush1.msra.mxu0 0.0
  %628 = vmatprep.subr.mxu0 0.0
  %629 = vmatpush1.msra.mxu0 0.0
  %630 = vmatprep.subr.mxu0 0.0
  %631 = vmatpush1.msra.mxu0 0.0
  %632 = vmatprep.subr.mxu0 0.0
  %633 = vmatpush1.msra.mxu0 0.0
  %634 = vmatprep.subr.mxu0 0.0
  %635 = vmatpush1.msra.mxu0 0.0
  %636 = vmatprep.subr.mxu0 0.0
  %637 = vmatpush1.msra.mxu0 0.0
  %638 = vmatprep.subr.mxu0 0.0
  %639 = vmatpush1.msra.mxu0 0.0
  %640 = vmatprep.subr.mxu0 0.0
  %641 = vmatpush1.msra.mxu0 0.0
  %642 = vmatprep.subr.mxu0 0.0
  %643 = vmatpush1.msra.mxu0 0.0
  %644 = vmatprep.subr.mxu0 0.0
  %645 = vmatpush1.msra.mxu0 0.0
  %646 = vmatprep.subr.mxu0 0.0
  %647 = vmatpush1.msra.mxu0 0.0
  %648 = vmatprep.mubr.f32.mxu0 0.0
  %649 = vmatmul.mubr.f32.gmra.mrb[0].mxu0 %v582
  %v650 = vpop.f32.mrb[0].mxu0
  %v651 = vadd.f32 %v577, %v650
  %v652 = vpop.f32.mrb[0].mxu0
  %v653 = vadd.f32 %v578, %v652
  %654 = vdwg.mxu0
  %v655 = vxor.u32 %v651, 2147483648
  %v656 = vxor.u32 %v653, 2147483648
  %v657 = vmul.f32 %v655, 1.442695
  %v658 = vpow.pop %v657
  %v659 = vmul.f32 %v656, 1.442695
  %v660 = vpow.pop %v659
  %v661 = vadd.f32 %v658, 1.0
  %v662 = vadd.f32 %v660, 1.0
  %v663 = vrcp.pop %v661
  %v664 = vmul.f32 1.0, %v663
  %v665 = vrcp.pop %v662
  %v666 = vmul.f32 1.0, %v665
  %v667 = vmul.f32 %v666, 2.0
  %v668 = vsub.f32 %v667, 1.0
  %v669 = vmul.f32 %v664, %v573
  %v670 = vmul.f32 %v664, %v668
  %672 = vrot.lane.b32.xlu0 %v670, 64
  %v673 = vpop.permute.xlu0 %672
  %v675 = vadd.f32 %v669, %v673
  %v676 = vtanh.pop %v675
  %v677 = vmul.f32 %v666, %v676
  %s678 = scalar_lea.vmem %s0, 112
  %v679 = vld [vmem:[%s678] sm:$0xff]
  %v680 = vld [vmem:[%s678 + $0x8] sm:$0xff]
  %682 = vrot.lane.b32.xlu0 %v677, 64
  %v683 = vpop.permute.xlu0 %682
  %v684 = vsel %vm66, %v683, 0
  %686 = vmatprep.subr.mxu0 %v18
  %687 = vmatpush1.msra.mxu0 %v17
  %688 = vmatprep.subr.mxu0 %v20
  %689 = vmatpush1.msra.mxu0 %v19
  %690 = vmatprep.subr.mxu0 %v22
  %691 = vmatpush1.msra.mxu0 %v21
  %692 = vmatprep.subr.mxu0 %v24
  %693 = vmatpush1.msra.mxu0 %v23
  %694 = vmatprep.subr.mxu0 %v26
  %695 = vmatpush1.msra.mxu0 %v25
  %696 = vmatprep.subr.mxu0 %v28
  %697 = vmatpush1.msra.mxu0 %v27
  %698 = vmatprep.subr.mxu0 %v30
  %699 = vmatpush1.msra.mxu0 %v29
  %700 = vmatprep.subr.mxu0 %v32
  %701 = vmatpush1.msra.mxu0 %v31
  %702 = vmatprep.subr.mxu0 0.0
  %703 = vmatpush1.msra.mxu0 0.0
  %704 = vmatprep.subr.mxu0 0.0
  %705 = vmatpush1.msra.mxu0 0.0
  %706 = vmatprep.subr.mxu0 0.0
  %707 = vmatpush1.msra.mxu0 0.0
  %708 = vmatprep.subr.mxu0 0.0
  %709 = vmatpush1.msra.mxu0 0.0
  %710 = vmatprep.subr.mxu0 0.0
  %711 = vmatpush1.msra.mxu0 0.0
  %712 = vmatprep.subr.mxu0 0.0
  %713 = vmatpush1.msra.mxu0 0.0
  %714 = vmatprep.subr.mxu0 0.0
  %715 = vmatpush1.msra.mxu0 0.0
  %716 = vmatprep.subr.mxu0 0.0
  %717 = vmatpush1.msra.mxu0 0.0
  %718 = vmatprep.subr.mxu0 0.0
  %719 = vmatpush1.msra.mxu0 0.0
  %720 = vmatprep.subr.mxu0 0.0
  %721 = vmatpush1.msra.mxu0 0.0
  %722 = vmatprep.subr.mxu0 0.0
  %723 = vmatpush1.msra.mxu0 0.0
  %724 = vmatprep.subr.mxu0 0.0
  %725 = vmatpush1.msra.mxu0 0.0
  %726 = vmatprep.subr.mxu0 0.0
  %727 = vmatpush1.msra.mxu0 0.0
  %728 = vmatprep.subr.mxu0 0.0
  %729 = vmatpush1.msra.mxu0 0.0
  %730 = vmatprep.subr.mxu0 0.0
  %731 = vmatpush1.msra.mxu0 0.0
  %732 = vmatprep.subr.mxu0 0.0
  %733 = vmatpush1.msra.mxu0 0.0
  %734 = vmatprep.subr.mxu0 0.0
  %735 = vmatpush1.msra.mxu0 0.0
  %736 = vmatprep.subr.mxu0 0.0
  %737 = vmatpush1.msra.mxu0 0.0
  %738 = vmatprep.subr.mxu0 0.0
  %739 = vmatpush1.msra.mxu0 0.0
  %740 = vmatprep.subr.mxu0 0.0
  %741 = vmatpush1.msra.mxu0 0.0
  %742 = vmatprep.subr.mxu0 0.0
  %743 = vmatpush1.msra.mxu0 0.0
  %744 = vmatprep.subr.mxu0 0.0
  %745 = vmatpush1.msra.mxu0 0.0
  %746 = vmatprep.subr.mxu0 0.0
  %747 = vmatpush1.msra.mxu0 0.0
  %748 = vmatprep.subr.mxu0 0.0
  %749 = vmatpush1.msra.mxu0 0.0
  %750 = vmatprep.mubr.f32.mxu0 0.0
  %751 = vmatmul.mubr.f32.gmra.mrb[0].mxu0 %v684
  %v752 = vpop.f32.mrb[0].mxu0
  %v753 = vadd.f32 %v679, %v752
  %v754 = vpop.f32.mrb[0].mxu0
  %v755 = vadd.f32 %v680, %v754
  %756 = vdwg.mxu0
  %v757 = vxor.u32 %v753, 2147483648
  %v758 = vxor.u32 %v755, 2147483648
  %v759 = vmul.f32 %v757, 1.442695
  %v760 = vpow.pop %v759
  %v761 = vmul.f32 %v758, 1.442695
  %v762 = vpow.pop %v761
  %v763 = vadd.f32 %v760, 1.0
  %v764 = vadd.f32 %v762, 1.0
  %v765 = vrcp.pop %v763
  %v766 = vmul.f32 1.0, %v765
  %v767 = vrcp.pop %v764
  %v768 = vmul.f32 1.0, %v767
  %v769 = vmul.f32 %v768, 2.0
  %v770 = vsub.f32 %v769, 1.0
  %v771 = vmul.f32 %v766, %v675
  %v772 = vmul.f32 %v766, %v770
  %774 = vrot.lane.b32.xlu0 %v772, 64
  %v775 = vpop.permute.xlu0 %774
  %v777 = vadd.f32 %v771, %v775
  %v778 = vtanh.pop %v777
  %v779 = vmul.f32 %v768, %v778
  %s780 = scalar_lea.vmem %s0, 128
  %v781 = vld [vmem:[%s780] sm:$0xff]
  %v782 = vld [vmem:[%s780 + $0x8] sm:$0xff]
  %784 = vrot.lane.b32.xlu0 %v779, 64
  %v785 = vpop.permute.xlu0 %784
  %v786 = vsel %vm66, %v785, 0
  %788 = vmatprep.subr.mxu0 %v18
  %789 = vmatpush1.msra.mxu0 %v17
  %790 = vmatprep.subr.mxu0 %v20
  %791 = vmatpush1.msra.mxu0 %v19
  %792 = vmatprep.subr.mxu0 %v22
  %793 = vmatpush1.msra.mxu0 %v21
  %794 = vmatprep.subr.mxu0 %v24
  %795 = vmatpush1.msra.mxu0 %v23
  %796 = vmatprep.subr.mxu0 %v26
  %797 = vmatpush1.msra.mxu0 %v25
  %798 = vmatprep.subr.mxu0 %v28
  %799 = vmatpush1.msra.mxu0 %v27
  %800 = vmatprep.subr.mxu0 %v30
  %801 = vmatpush1.msra.mxu0 %v29
  %802 = vmatprep.subr.mxu0 %v32
  %803 = vmatpush1.msra.mxu0 %v31
  %804 = vmatprep.subr.mxu0 0.0
  %805 = vmatpush1.msra.mxu0 0.0
  %806 = vmatprep.subr.mxu0 0.0
  %807 = vmatpush1.msra.mxu0 0.0
  %808 = vmatprep.subr.mxu0 0.0
  %809 = vmatpush1.msra.mxu0 0.0
  %810 = vmatprep.subr.mxu0 0.0
  %811 = vmatpush1.msra.mxu0 0.0
  %812 = vmatprep.subr.mxu0 0.0
  %813 = vmatpush1.msra.mxu0 0.0
  %814 = vmatprep.subr.mxu0 0.0
  %815 = vmatpush1.msra.mxu0 0.0
  %816 = vmatprep.subr.mxu0 0.0
  %817 = vmatpush1.msra.mxu0 0.0
  %818 = vmatprep.subr.mxu0 0.0
  %819 = vmatpush1.msra.mxu0 0.0
  %820 = vmatprep.subr.mxu0 0.0
  %821 = vmatpush1.msra.mxu0 0.0
  %822 = vmatprep.subr.mxu0 0.0
  %823 = vmatpush1.msra.mxu0 0.0
  %824 = vmatprep.subr.mxu0 0.0
  %825 = vmatpush1.msra.mxu0 0.0
  %826 = vmatprep.subr.mxu0 0.0
  %827 = vmatpush1.msra.mxu0 0.0
  %828 = vmatprep.subr.mxu0 0.0
  %829 = vmatpush1.msra.mxu0 0.0
  %830 = vmatprep.subr.mxu0 0.0
  %831 = vmatpush1.msra.mxu0 0.0
  %832 = vmatprep.subr.mxu0 0.0
  %833 = vmatpush1.msra.mxu0 0.0
  %834 = vmatprep.subr.mxu0 0.0
  %835 = vmatpush1.msra.mxu0 0.0
  %836 = vmatprep.subr.mxu0 0.0
  %837 = vmatpush1.msra.mxu0 0.0
  %838 = vmatprep.subr.mxu0 0.0
  %839 = vmatpush1.msra.mxu0 0.0
  %840 = vmatprep.subr.mxu0 0.0
  %841 = vmatpush1.msra.mxu0 0.0
  %842 = vmatprep.subr.mxu0 0.0
  %843 = vmatpush1.msra.mxu0 0.0
  %844 = vmatprep.subr.mxu0 0.0
  %845 = vmatpush1.msra.mxu0 0.0
  %846 = vmatprep.subr.mxu0 0.0
  %847 = vmatpush1.msra.mxu0 0.0
  %848 = vmatprep.subr.mxu0 0.0
  %849 = vmatpush1.msra.mxu0 0.0
  %850 = vmatprep.subr.mxu0 0.0
  %851 = vmatpush1.msra.mxu0 0.0
  %852 = vmatprep.mubr.f32.mxu0 0.0
  %853 = vmatmul.mubr.f32.gmra.mrb[0].mxu0 %v786
  %v854 = vpop.f32.mrb[0].mxu0
  %v855 = vadd.f32 %v781, %v854
  %v856 = vpop.f32.mrb[0].mxu0
  %v857 = vadd.f32 %v782, %v856
  %858 = vdwg.mxu0
  %v859 = vxor.u32 %v855, 2147483648
  %v860 = vxor.u32 %v857, 2147483648
  %v861 = vmul.f32 %v859, 1.442695
  %v862 = vpow.pop %v861
  %v863 = vmul.f32 %v860, 1.442695
  %v864 = vpow.pop %v863
  %v865 = vadd.f32 %v862, 1.0
  %v866 = vadd.f32 %v864, 1.0
  %v867 = vrcp.pop %v865
  %v868 = vmul.f32 1.0, %v867
  %v869 = vrcp.pop %v866
  %v870 = vmul.f32 1.0, %v869
  %v871 = vmul.f32 %v870, 2.0
  %v872 = vsub.f32 %v871, 1.0
  %v873 = vmul.f32 %v868, %v777
  %v874 = vmul.f32 %v868, %v872
  %876 = vrot.lane.b32.xlu0 %v874, 64
  %v877 = vpop.permute.xlu0 %876
  %v879 = vadd.f32 %v873, %v877
  %v880 = vtanh.pop %v879
  %v881 = vmul.f32 %v870, %v880
  %v882 = vld [vmem:[%s2] sm:$0xff]
  %v883 = vld [vmem:[%s2 + $0x8] sm:$0xff]
  %v884 = vld [vmem:[%s2 + $0x10] sm:$0xff]
  %v885 = vld [vmem:[%s2 + $0x18] sm:$0xff]
  %v886 = vld [vmem:[%s3] sm:$0x1]
  %v888 = vlaneseq
  %v889 = vshrl.u32 %v888, 7
  %v890 = vsub.s32 0, %v889
  %v891 = vrot.slane %v886, %v890
  %894 = vrot.lane.b32.xlu0 %v881, 32
  %v895 = vpop.permute.xlu0 %894
  %v896 = vsel %vm60, %v895, 0
  %898 = vmatprep.subr.mxu0 0.0
  %899 = vmatpush1.msra.mxu0 %v882
  %900 = vmatprep.subr.mxu0 0.0
  %901 = vmatpush1.msra.mxu0 %v883
  %902 = vmatprep.subr.mxu0 0.0
  %903 = vmatpush1.msra.mxu0 %v884
  %904 = vmatprep.subr.mxu0 0.0
  %905 = vmatpush1.msra.mxu0 %v885
  %906 = vmatprep.subr.mxu0 0.0
  %907 = vmatpush1.msra.mxu0 0.0
  %908 = vmatprep.subr.mxu0 0.0
  %909 = vmatpush1.msra.mxu0 0.0
  %910 = vmatprep.subr.mxu0 0.0
  %911 = vmatpush1.msra.mxu0 0.0
  %912 = vmatprep.subr.mxu0 0.0
  %913 = vmatpush1.msra.mxu0 0.0
  %914 = vmatprep.subr.mxu0 0.0
  %915 = vmatpush1.msra.mxu0 0.0
  %916 = vmatprep.subr.mxu0 0.0
  %917 = vmatpush1.msra.mxu0 0.0
  %918 = vmatprep.subr.mxu0 0.0
  %919 = vmatpush1.msra.mxu0 0.0
  %920 = vmatprep.subr.mxu0 0.0
  %921 = vmatpush1.msra.mxu0 0.0
  %922 = vmatprep.subr.mxu0 0.0
  %923 = vmatpush1.msra.mxu0 0.0
  %924 = vmatprep.subr.mxu0 0.0
  %925 = vmatpush1.msra.mxu0 0.0
  %926 = vmatprep.subr.mxu0 0.0
  %927 = vmatpush1.msra.mxu0 0.0
  %928 = vmatprep.subr.mxu0 0.0
  %929 = vmatpush1.msra.mxu0 0.0
  %930 = vmatprep.subr.mxu0 0.0
  %931 = vmatpush1.msra.mxu0 0.0
  %932 = vmatprep.subr.mxu0 0.0
  %933 = vmatpush1.msra.mxu0 0.0
  %934 = vmatprep.subr.mxu0 0.0
  %935 = vmatpush1.msra.mxu0 0.0
  %936 = vmatprep.subr.mxu0 0.0
  %937 = vmatpush1.msra.mxu0 0.0
  %938 = vmatprep.subr.mxu0 0.0
  %939 = vmatpush1.msra.mxu0 0.0
  %940 = vmatprep.subr.mxu0 0.0
  %941 = vmatpush1.msra.mxu0 0.0
  %942 = vmatprep.subr.mxu0 0.0
  %943 = vmatpush1.msra.mxu0 0.0
  %944 = vmatprep.subr.mxu0 0.0
  %945 = vmatpush1.msra.mxu0 0.0
  %946 = vmatprep.subr.mxu0 0.0
  %947 = vmatpush1.msra.mxu0 0.0
  %948 = vmatprep.subr.mxu0 0.0
  %949 = vmatpush1.msra.mxu0 0.0
  %950 = vmatprep.subr.mxu0 0.0
  %951 = vmatpush1.msra.mxu0 0.0
  %952 = vmatprep.subr.mxu0 0.0
  %953 = vmatpush1.msra.mxu0 0.0
  %954 = vmatprep.subr.mxu0 0.0
  %955 = vmatpush1.msra.mxu0 0.0
  %956 = vmatprep.subr.mxu0 0.0
  %957 = vmatpush1.msra.mxu0 0.0
  %958 = vmatprep.subr.mxu0 0.0
  %959 = vmatpush1.msra.mxu0 0.0
  %960 = vmatprep.subr.mxu0 0.0
  %961 = vmatpush1.msra.mxu0 0.0
  %962 = vmatprep.mubr.f32.mxu0 0.0
  %963 = vmatmul.mubr.f32.gmra.mrb[0].mxu0 %v896
  %v964 = vpop.f32.mrb[0].mxu0
  %v965 = vadd.f32 %v891, %v964
  %v966 = vpop.f32.mrb[0].mxu0
  %967 = vdwg.mxu0
  %968 = vst [vmem:[%s4] sm:$0xff] %v965
  // Predicated region
  $region18: #{lstm_forward.1} parent=0 // pred_check
    _
  $region19: #{lstm_forward.1} parent=0 // pred_check_branch
    %970 = sbr.rel (0) target = $region21
  $region20: #{lstm_forward.1} parent=0 // pred_region
    _
  $region21: #{lstm_forward.1} parent=0 // pred_fallthru
    _
  // Predicated region
  $region22: #{lstm_forward.1} parent=0 // pred_check
    _
  $region23: #{lstm_forward.1} parent=0 // pred_check_branch
    %972 = sbr.rel (0) target = $region25
  $region24: #{lstm_forward.1} parent=0 // pred_region
    _
  $region25: #{lstm_forward.1} parent=0 // pred_fallthru
    _

</llo_original>
